<compile_context>
chip_gen: v5e
topology: v5e:2x2
jax: 0.10.0
libtpu: 0.0.40
codegen_flags: <defaults>
</compile_context>

<pallas_src>
import functools

import jax
import jax.numpy as jnp
from jax.experimental import pallas as pl
from jax.experimental.pallas import tpu as pltpu


def _round_up(v, m):
    return ((v + m - 1) // m) * m


def ffn_kernel(x_ref, w1r_ref, b1r_ref, w2_ref, b2_ref, gamma_ref, beta_ref,
               o_ref, *, h_real, hp):
    # x tile (TM, Dp) f32 -> bf16 for the MXU; accumulate in f32.
    x_bf = x_ref[...].astype(jnp.bfloat16)

    # Fused fc1 + residual_proj: one (TM, Dp) x (Dp, 2*Hp) matmul.
    hr = jnp.dot(x_bf, w1r_ref[...], preferred_element_type=jnp.float32) + b1r_ref[...]
    h = jnp.maximum(hr[:, :hp], 0.0)        # relu(fc1(x))
    residual = hr[:, hp:]                   # residual_proj(x)
    # TODO(synk): training-mode dropout (pltpu.prng_seed/prng_random_bits mask) not
    # implemented; nn.Dropout is identity in eval mode.

    # fc2
    out = jnp.dot(h.astype(jnp.bfloat16), w2_ref[...],
                  preferred_element_type=jnp.float32) + b2_ref[...]

    # LayerNorm(out + residual), eps=1e-6 over the real H features.
    # Padded columns of y are exactly zero (zero-padded weights/biases); mask them
    # out of the centered term so mean/var use only the real H columns.
    y = out + residual
    inv_h = 1.0 / float(h_real)
    mean = jnp.sum(y, axis=-1, keepdims=True) * inv_h
    lane = jax.lax.broadcasted_iota(jnp.int32, y.shape, 1)
    mask = (lane < h_real).astype(jnp.float32)
    centered = (y - mean) * mask
    var = jnp.sum(centered * centered, axis=-1, keepdims=True) * inv_h
    y_norm = centered * jax.lax.rsqrt(var + 1e-6)
    o_ref[...] = (y_norm * gamma_ref[...] + beta_ref[...]).astype(o_ref.dtype)


def positionwise_ffn(x, params, *, tm=256):
    """x: (batch, seq, dimension) float32 -> (batch, seq, d_hid) float32."""
    B, S, D = x.shape
    H = params["w1"].shape[1]
    M = B * S

    Dp = _round_up(D, 128)
    Hp = _round_up(H, 128)
    TM = min(tm, _round_up(M, 8))
    Mp = _round_up(M, TM)

    # Zero-pad activations to (Mp, Dp): padded rows/cols contribute nothing to matmuls.
    x2d = jnp.pad(x.reshape(M, D), ((0, Mp - M), (0, Dp - D)))

    def pad2(a, r, c):
        return jnp.pad(a, ((0, r - a.shape[0]), (0, c - a.shape[1])))

    def pad1(a, c):
        return jnp.pad(a.reshape(1, -1), ((0, 0), (0, c - a.shape[0])))

    # Fuse fc1 and residual_proj weights along the output axis: (Dp, 2*Hp), bf16.
    w1r = jnp.concatenate([pad2(params["w1"], Dp, Hp),
                           pad2(params["wr"], Dp, Hp)], axis=1).astype(jnp.bfloat16)
    b1r = jnp.concatenate([pad1(params["b1"], Hp), pad1(params["br"], Hp)], axis=1)
    w2 = pad2(params["w2"], Hp, Hp).astype(jnp.bfloat16)
    b2 = pad1(params["b2"], Hp)
    gamma = pad1(params["gamma"], Hp)
    beta = pad1(params["beta"], Hp)

    resident = lambda shape: pl.BlockSpec(shape, lambda i: (0, 0))

    # Explicit VMEM budget: resident weights + double-buffered x/out tiles (+headroom).
    vmem_bytes = (w1r.size * 2 + w2.size * 2
                  + 4 * (b1r.size + b2.size + gamma.size + beta.size)
                  + 2 * (TM * Dp * 4 + TM * Hp * 4))
    vmem_limit = int(min(64 * 2**20, max(32 * 2**20, int(vmem_bytes * 1.5))))

    kernel = functools.partial(ffn_kernel, h_real=H, hp=Hp)

    out2d = pl.pallas_call(
        kernel,
        out_shape=jax.ShapeDtypeStruct((Mp, Hp), jnp.float32),
        grid_spec=pltpu.PrefetchScalarGridSpec(
            num_scalar_prefetch=0,
            grid=(Mp // TM,),
            in_specs=[
                pl.BlockSpec((TM, Dp), lambda i: (i, 0)),  # x tile (streamed)
                resident((Dp, 2 * Hp)),                    # [w1 | wr]  bf16
                resident((1, 2 * Hp)),                     # [b1 | br]
                resident((Hp, Hp)),                        # w2         bf16
                resident((1, Hp)),                         # b2
                resident((1, Hp)),                         # gamma
                resident((1, Hp)),                         # beta
            ],
            out_specs=pl.BlockSpec((TM, Hp), lambda i: (i, 0)),
        ),
        compiler_params=pltpu.CompilerParams(
            dimension_semantics=("parallel",),
            vmem_limit_bytes=vmem_limit),
    )(x2d, w1r, b1r, w2, b2, gamma, beta)

    return out2d[:M, :H].reshape(B, S, H)


def init_params(key, dimension, d_hid):
    ks = jax.random.split(key, 6)
    scale1 = 1.0 / jnp.sqrt(dimension)
    scale2 = 1.0 / jnp.sqrt(d_hid)
    return {
        # stored as (in, out); PyTorch Linear stores (out, in) and does x @ W.T
        "w1": jax.random.uniform(ks[0], (dimension, d_hid), jnp.float32, -scale1, scale1),
        "b1": jax.random.uniform(ks[1], (d_hid,), jnp.float32, -scale1, scale1),
        "w2": jax.random.uniform(ks[2], (d_hid, d_hid), jnp.float32, -scale2, scale2),
        "b2": jax.random.uniform(ks[3], (d_hid,), jnp.float32, -scale2, scale2),
        "wr": jax.random.uniform(ks[4], (dimension, d_hid), jnp.float32, -scale1, scale1),
        "br": jax.random.uniform(ks[5], (d_hid,), jnp.float32, -scale1, scale1),
        "gamma": jnp.ones((d_hid,), jnp.float32),
        "beta": jnp.zeros((d_hid,), jnp.float32),
    }


if __name__ == "__main__":
    batch, seq, dimension, d_hid = 2, 8, 16, 32
    key = jax.random.PRNGKey(0)
    kx, kp = jax.random.split(key)
    x = jax.random.normal(kx, (batch, seq, dimension), jnp.float32)
    params = init_params(kp, dimension, d_hid)

    out = positionwise_ffn(x, params)
    jax.block_until_ready(out)
    assert out.shape == (batch, seq, d_hid)
    print("KERNEL_OK")
</pallas_src>

<mosaic_0001>
module attributes {stable_mosaic.version = 11 : i64} {
  func.func @ffn_kernel(%arg0: i32, %arg1: memref<16x128xf32, #tpu.memory_space<vmem>>, %arg2: memref<128x256xbf16, #tpu.memory_space<vmem>>, %arg3: memref<1x256xf32, #tpu.memory_space<vmem>>, %arg4: memref<128x128xbf16, #tpu.memory_space<vmem>>, %arg5: memref<1x128xf32, #tpu.memory_space<vmem>>, %arg6: memref<1x128xf32, #tpu.memory_space<vmem>>, %arg7: memref<1x128xf32, #tpu.memory_space<vmem>>, %arg8: memref<16x128xf32, #tpu.memory_space<vmem>>) attributes {dimension_semantics = [#tpu.dimension_semantics<parallel>], iteration_bounds = array<i64: 1>, scalar_prefetch = 0 : i64, scratch_operands = 0 : i64, tpu.core_type = #tpu.core_type<tc>, window_params = [{transform_indices = @transform_0, window_bounds = array<i64: 16, 128>}, {pipeline_mode = #tpu.pipeline_mode<synchronous>, transform_indices = @transform_1, window_bounds = array<i64: 128, 256>}, {pipeline_mode = #tpu.pipeline_mode<synchronous>, transform_indices = @transform_2, window_bounds = array<i64: 1, 256>}, {pipeline_mode = #tpu.pipeline_mode<synchronous>, transform_indices = @transform_3, window_bounds = array<i64: 128, 128>}, {pipeline_mode = #tpu.pipeline_mode<synchronous>, transform_indices = @transform_4, window_bounds = array<i64: 1, 128>}, {pipeline_mode = #tpu.pipeline_mode<synchronous>, transform_indices = @transform_5, window_bounds = array<i64: 1, 128>}, {pipeline_mode = #tpu.pipeline_mode<synchronous>, transform_indices = @transform_6, window_bounds = array<i64: 1, 128>}, {transform_indices = @transform_7, window_bounds = array<i64: 16, 128>}]} {
    %c0 = arith.constant 0 : index
    %c0_0 = arith.constant 0 : index
    %0 = vector.load %arg1[%c0, %c0_0] : memref<16x128xf32, #tpu.memory_space<vmem>>, vector<16x128xf32>
    %1 = arith.truncf %0 : vector<16x128xf32> to vector<16x128xbf16>
    %c0_1 = arith.constant 0 : index
    %c0_2 = arith.constant 0 : index
    %2 = vector.load %arg2[%c0_1, %c0_2] : memref<128x256xbf16, #tpu.memory_space<vmem>>, vector<128x256xbf16>
    %cst = arith.constant dense<0.000000e+00> : vector<16x256xf32>
    %3 = tpu.matmul %1, %2, %cst {dimension_numbers = #tpu.dot_dimension_numbers<[1], [0], [0], [1], [0, 0, 1, 1], [], []>} : vector<16x128xbf16>, vector<128x256xbf16>, vector<16x256xf32> -> vector<16x256xf32>
    %c0_3 = arith.constant 0 : index
    %c0_4 = arith.constant 0 : index
    %4 = vector.load %arg3[%c0_3, %c0_4] : memref<1x256xf32, #tpu.memory_space<vmem>>, vector<1x256xf32>
    %5 = vector.broadcast %4 : vector<1x256xf32> to vector<16x256xf32>
    %6 = arith.addf %3, %5 : vector<16x256xf32>
    %7 = vector.extract_strided_slice %6 {offsets = [0, 0], sizes = [16, 128], strides = [1, 1]} : vector<16x256xf32> to vector<16x128xf32>
    %cst_5 = arith.constant 0.000000e+00 : f32
    %8 = vector.broadcast %cst_5 : f32 to vector<16x128xf32>
    %9 = arith.maximumf %7, %8 : vector<16x128xf32>
    %10 = vector.extract_strided_slice %6 {offsets = [0, 128], sizes = [16, 128], strides = [1, 1]} : vector<16x256xf32> to vector<16x128xf32>
    %11 = arith.truncf %9 : vector<16x128xf32> to vector<16x128xbf16>
    %c0_6 = arith.constant 0 : index
    %c0_7 = arith.constant 0 : index
    %12 = vector.load %arg4[%c0_6, %c0_7] : memref<128x128xbf16, #tpu.memory_space<vmem>>, vector<128x128xbf16>
    %cst_8 = arith.constant dense<0.000000e+00> : vector<16x128xf32>
    %13 = tpu.matmul %11, %12, %cst_8 {dimension_numbers = #tpu.dot_dimension_numbers<[1], [0], [0], [1], [0, 0, 1, 1], [], []>} : vector<16x128xbf16>, vector<128x128xbf16>, vector<16x128xf32> -> vector<16x128xf32>
    %c0_9 = arith.constant 0 : index
    %c0_10 = arith.constant 0 : index
    %14 = vector.load %arg5[%c0_9, %c0_10] : memref<1x128xf32, #tpu.memory_space<vmem>>, vector<1x128xf32>
    %15 = vector.broadcast %14 : vector<1x128xf32> to vector<16x128xf32>
    %16 = arith.addf %13, %15 : vector<16x128xf32>
    %17 = arith.addf %16, %10 : vector<16x128xf32>
    %cst_11 = arith.constant dense<0.000000e+00> : vector<16xf32>
    %18 = vector.multi_reduction <add>, %17, %cst_11 [1] : vector<16x128xf32> to vector<16xf32>
    %19 = vector.shape_cast %18 : vector<16xf32> to vector<16x1xf32>
    %cst_12 = arith.constant 3.125000e-02 : f32
    %20 = vector.broadcast %cst_12 : f32 to vector<16x1xf32>
    %21 = arith.mulf %19, %20 : vector<16x1xf32>
    %22 = tpu.iota {dimensions = array<i32: 1>} : vector<16x128xi32>
    %c32_i32 = arith.constant 32 : i32
    %23 = vector.broadcast %c32_i32 : i32 to vector<16x128xi32>
    %24 = arith.cmpi slt, %22, %23 : vector<16x128xi32>
    %25 = arith.extui %24 : vector<16x128xi1> to vector<16x128xi32>
    %26 = arith.sitofp %25 : vector<16x128xi32> to vector<16x128xf32>
    %27 = vector.broadcast %21 : vector<16x1xf32> to vector<16x128xf32>
    %28 = arith.subf %17, %27 : vector<16x128xf32>
    %29 = arith.mulf %28, %26 : vector<16x128xf32>
    %30 = arith.mulf %29, %29 : vector<16x128xf32>
    %cst_13 = arith.constant dense<0.000000e+00> : vector<16xf32>
    %31 = vector.multi_reduction <add>, %30, %cst_13 [1] : vector<16x128xf32> to vector<16xf32>
    %32 = vector.shape_cast %31 : vector<16xf32> to vector<16x1xf32>
    %cst_14 = arith.constant 3.125000e-02 : f32
    %33 = vector.broadcast %cst_14 : f32 to vector<16x1xf32>
    %34 = arith.mulf %32, %33 : vector<16x1xf32>
    %cst_15 = arith.constant 9.99999997E-7 : f32
    %35 = vector.broadcast %cst_15 : f32 to vector<16x1xf32>
    %36 = arith.addf %34, %35 : vector<16x1xf32>
    %37 = math.rsqrt %36 : vector<16x1xf32>
    %38 = vector.broadcast %37 : vector<16x1xf32> to vector<16x128xf32>
    %39 = arith.mulf %29, %38 : vector<16x128xf32>
    %c0_16 = arith.constant 0 : index
    %c0_17 = arith.constant 0 : index
    %40 = vector.load %arg6[%c0_16, %c0_17] : memref<1x128xf32, #tpu.memory_space<vmem>>, vector<1x128xf32>
    %41 = vector.broadcast %40 : vector<1x128xf32> to vector<16x128xf32>
    %42 = arith.mulf %39, %41 : vector<16x128xf32>
    %c0_18 = arith.constant 0 : index
    %c0_19 = arith.constant 0 : index
    %43 = vector.load %arg7[%c0_18, %c0_19] : memref<1x128xf32, #tpu.memory_space<vmem>>, vector<1x128xf32>
    %44 = vector.broadcast %43 : vector<1x128xf32> to vector<16x128xf32>
    %45 = arith.addf %42, %44 : vector<16x128xf32>
    %c0_20 = arith.constant 0 : index
    %c0_21 = arith.constant 0 : index
    %46 = vector.load %arg8[%c0_20, %c0_21] : memref<16x128xf32, #tpu.memory_space<vmem>>, vector<16x128xf32>
    tpu.vector_store %arg8[%c0_20, %c0_21], %45 {strides = array<i32>} : memref<16x128xf32, #tpu.memory_space<vmem>>, vector<16x128xf32>,
    return
  }
  func.func @transform_0(%arg0: i32) -> (i32, i32) {
    %c0_i32 = arith.constant 0 : i32
    %c0_i32_0 = arith.constant 0 : i32
    return %arg0, %c0_i32 : i32, i32
  }
  func.func @transform_1(%arg0: i32) -> (i32, i32) {
    %c0_i32 = arith.constant 0 : i32
    %c0_i32_0 = arith.constant 0 : i32
    %c0_i32_1 = arith.constant 0 : i32
    return %c0_i32, %c0_i32_0 : i32, i32
  }
  func.func @transform_2(%arg0: i32) -> (i32, i32) {
    %c0_i32 = arith.constant 0 : i32
    %c0_i32_0 = arith.constant 0 : i32
    %c0_i32_1 = arith.constant 0 : i32
    return %c0_i32, %c0_i32_0 : i32, i32
  }
  func.func @transform_3(%arg0: i32) -> (i32, i32) {
    %c0_i32 = arith.constant 0 : i32
    %c0_i32_0 = arith.constant 0 : i32
    %c0_i32_1 = arith.constant 0 : i32
    return %c0_i32, %c0_i32_0 : i32, i32
  }
  func.func @transform_4(%arg0: i32) -> (i32, i32) {
    %c0_i32 = arith.constant 0 : i32
    %c0_i32_0 = arith.constant 0 : i32
    %c0_i32_1 = arith.constant 0 : i32
    return %c0_i32, %c0_i32_0 : i32, i32
  }
  func.func @transform_5(%arg0: i32) -> (i32, i32) {
    %c0_i32 = arith.constant 0 : i32
    %c0_i32_0 = arith.constant 0 : i32
    %c0_i32_1 = arith.constant 0 : i32
    return %c0_i32, %c0_i32_0 : i32, i32
  }
  func.func @transform_6(%arg0: i32) -> (i32, i32) {
    %c0_i32 = arith.constant 0 : i32
    %c0_i32_0 = arith.constant 0 : i32
    %c0_i32_1 = arith.constant 0 : i32
    return %c0_i32, %c0_i32_0 : i32, i32
  }
  func.func @transform_7(%arg0: i32) -> (i32, i32) {
    %c0_i32 = arith.constant 0 : i32
    %c0_i32_0 = arith.constant 0 : i32
    return %arg0, %c0_i32 : i32, i32
  }
}

</mosaic_0001>

<llo_original>
// kernel: tpu_custom_call.1
$region0: #{tpu_custom_call.1}
  #allocation0 [shape = 'u32[]', space=smem, size = 0x4, offset = 0x4, fixed_abs, tag = 'smem constant byte address 0x4 - core index']
  #allocation1 [shape = 'u32[72,128]{1,0:T(1,128)}', space=vmem, size = 0x9000, scoped, tag = 'internal scratch']
  %s0 = inlined_call_operand.hbm [shape: f32[16,128], index: 0, kind: input, shape index: {}]
  %s1 = inlined_call_operand.hbm [shape: bf16[128,256], index: 1, kind: input, shape index: {}]
  %s2 = inlined_call_operand.hbm [shape: f32[1,256], index: 2, kind: input, shape index: {}]
  %s3 = inlined_call_operand.hbm [shape: bf16[128,128], index: 3, kind: input, shape index: {}]
  %s4 = inlined_call_operand.vmem [shape: f32[1,128], index: 4, kind: input, shape index: {}]
  %s5 = inlined_call_operand.vmem [shape: f32[1,128], index: 5, kind: input, shape index: {}]
  %s6 = inlined_call_operand.vmem [shape: f32[1,128], index: 6, kind: input, shape index: {}]
  %s7 = inlined_call_operand.hbm [shape: f32[16,128], index: 7, kind: output, shape index: {}]
  %s8 = sld [smem:[#allocation0]]
  $region54: #{tpu_custom_call.1} parent=0
    _
  %s10 = ssub.s32 1, %s8
  %s11 = scalar_select 0, %s10, %s8
  $region1: #{tpu_custom_call.1} parent=0
    #allocation2 [shape = 'u8[8192]{0}', space=vmem, size = 0x2000, scoped, tag = 'input window, operand 0, single buffered']
    #allocation3 [shape = 's32[1]{0}', space=sflag, size = 0x4, scoped, tag = 'scoped memory for tpu_custom_call.1']
    #allocation4 [shape = 's32[1]{0}', space=sflag, size = 0x4, scoped, tag = 'scoped memory for tpu_custom_call.1']
    #allocation5 [shape = 'u8[65536]{0}', space=vmem, size = 0x10000, scoped, tag = 'input window, operand 1, single buffered']
    #allocation6 [shape = 's32[1]{0}', space=sflag, size = 0x4, scoped, tag = 'scoped memory for tpu_custom_call.1']
    #allocation7 [shape = 'u8[1024]{0}', space=vmem, size = 0x400, scoped, tag = 'input window, operand 2, single buffered']
    #allocation8 [shape = 'u8[32768]{0}', space=vmem, size = 0x8000, scoped, tag = 'input window, operand 3, single buffered']
    #allocation9 [shape = 's32[1]{0}', space=sflag, size = 0x4, scoped, tag = 'scoped memory for tpu_custom_call.1']
    #allocation10 [shape = 'u8[8192]{0}', space=vmem, size = 0x2000, scoped, tag = 'output window, operand 0, single buffered']
    %12 = vsyncpa [#allocation3], 0
    %13 = vsyncpa [#allocation6], 0
    %14 = vsyncpa [#allocation9], 0
    %15 = vsyncpa [#allocation4], 0
    // Predicated region
    $region2: #{tpu_custom_call.1} parent=1 // pred_check
      _
    $region3: #{tpu_custom_call.1} parent=1 // pred_check_branch
      %17 = sbr.rel (0) target = $region5
    $region4: #{tpu_custom_call.1} parent=1 // pred_region
      %19 = vsyncadd [#allocation3], 0
      %s20 = sshll.u32 %s0, 4
      %s21 = int_to_ptr.hbm [resolvable:$true] %s20
      %s22 = sshll.u32 [#allocation2], 4
      %s23 = int_to_ptr.vmem [resolvable:$true] %s22
      %28 = dma.hbm_to_vmem [thread:$0]  %s21, 256, %s23, [#allocation3], 128, 128, 8
    $region5: #{tpu_custom_call.1} parent=1 // pred_fallthru
      _
    // Predicated region
    $region6: #{tpu_custom_call.1} parent=1 // pred_check
      _
    $region7: #{tpu_custom_call.1} parent=1 // pred_check_branch
      %30 = sbr.rel (0) target = $region9
    $region8: #{tpu_custom_call.1} parent=1 // pred_region
      %32 = vsyncadd [#allocation6], 0
      %s33 = sshll.u32 %s1, 4
      %s34 = int_to_ptr.hbm [resolvable:$true] %s33
      %s35 = sshll.u32 [#allocation5], 4
      %s36 = int_to_ptr.vmem [resolvable:$true] %s35
      %41 = dma.hbm_to_vmem [thread:$0]  %s34, 2048, %s36, [#allocation6], 128, 128, 8
    $region9: #{tpu_custom_call.1} parent=1 // pred_fallthru
      _
    // Predicated region
    $region10: #{tpu_custom_call.1} parent=1 // pred_check
      _
    $region11: #{tpu_custom_call.1} parent=1 // pred_check_branch
      %43 = sbr.rel (0) target = $region13
    $region12: #{tpu_custom_call.1} parent=1 // pred_region
      %45 = vsyncadd [#allocation6], 0
      %s47 = sshll.u32 %s2, 4
      %s48 = int_to_ptr.hbm [resolvable:$true] %s47
      %s49 = sshll.u32 [#allocation7], 4
      %s50 = int_to_ptr.vmem [resolvable:$true] %s49
      %52 = dma.hbm_to_vmem [thread:$0]  %s48, 32, %s50, [#allocation6]
    $region13: #{tpu_custom_call.1} parent=1 // pred_fallthru
      _
    // Predicated region
    $region14: #{tpu_custom_call.1} parent=1 // pred_check
      _
    $region15: #{tpu_custom_call.1} parent=1 // pred_check_branch
      %54 = sbr.rel (0) target = $region17
    $region16: #{tpu_custom_call.1} parent=1 // pred_region
      %56 = vsyncadd [#allocation9], 0
      %s57 = sshll.u32 %s3, 4
      %s58 = int_to_ptr.hbm [resolvable:$true] %s57
      %s59 = sshll.u32 [#allocation8], 4
      %s60 = int_to_ptr.vmem [resolvable:$true] %s59
      %65 = dma.hbm_to_vmem [thread:$0]  %s58, 1024, %s60, [#allocation9], 64, 64, 4
    $region17: #{tpu_custom_call.1} parent=1 // pred_fallthru
      _
    // Predicated region
    $region18: #{tpu_custom_call.1} parent=1 // pred_check
      _
    $region19: #{tpu_custom_call.1} parent=1 // pred_check_branch
      %67 = sbr.rel (0) target = $region21
    $region20: #{tpu_custom_call.1} parent=1 // pred_region
      _
    $region21: #{tpu_custom_call.1} parent=1 // pred_fallthru
      _
    // Predicated region
    $region22: #{tpu_custom_call.1} parent=1 // pred_check
      _
    $region23: #{tpu_custom_call.1} parent=1 // pred_check_branch
      %69 = sbr.rel (0) target = $region25
    $region24: #{tpu_custom_call.1} parent=1 // pred_region
      _
    $region25: #{tpu_custom_call.1} parent=1 // pred_fallthru
      _
    // Predicated region
    $region26: #{tpu_custom_call.1} parent=1 // pred_check
      _
    $region27: #{tpu_custom_call.1} parent=1 // pred_check_branch
      %71 = sbr.rel (0) target = $region29
    $region28: #{tpu_custom_call.1} parent=1 // pred_region
      _
    $region29: #{tpu_custom_call.1} parent=1 // pred_fallthru
      _
    // Predicated region
    $region30: #{tpu_custom_call.1} parent=1 // pred_check
      _
    $region31: #{tpu_custom_call.1} parent=1 // pred_check_branch
      %73 = sbr.rel (0) target = $region33
    $region32: #{tpu_custom_call.1} parent=1 // pred_region
      %75 = dma.done [#allocation3], 256
    $region33: #{tpu_custom_call.1} parent=1 // pred_fallthru
      _
    // Predicated region
    $region34: #{tpu_custom_call.1} parent=1 // pred_check
      _
    $region35: #{tpu_custom_call.1} parent=1 // pred_check_branch
      %77 = sbr.rel (0) target = $region37
    $region36: #{tpu_custom_call.1} parent=1 // pred_region
      %79 = dma.done [#allocation6], 2048
    $region37: #{tpu_custom_call.1} parent=1 // pred_fallthru
      _
    // Predicated region
    $region38: #{tpu_custom_call.1} parent=1 // pred_check
      _
    $region39: #{tpu_custom_call.1} parent=1 // pred_check_branch
      %81 = sbr.rel (0) target = $region41
    $region40: #{tpu_custom_call.1} parent=1 // pred_region
      %83 = dma.done [#allocation6], 32
    $region41: #{tpu_custom_call.1} parent=1 // pred_fallthru
      _
    // Predicated region
    $region42: #{tpu_custom_call.1} parent=1 // pred_check
      _
    $region43: #{tpu_custom_call.1} parent=1 // pred_check_branch
      %85 = sbr.rel (0) target = $region45
    $region44: #{tpu_custom_call.1} parent=1 // pred_region
      %87 = dma.done [#allocation9], 1024
    $region45: #{tpu_custom_call.1} parent=1 // pred_fallthru
      _
    %v88 = vld [vmem:[#allocation2] sm:$0xff]
    %v89 = vld [vmem:[#allocation2 + $0x8] sm:$0xff]
    %v90 = vpack.c.bf16 %v89, %v88
    %v91 = vld [vmem:[#allocation5] sm:$0xff]
    %v92 = vld [vmem:[#allocation5 + $0x8] sm:$0xff]
    %v93 = vld [vmem:[#allocation5 + $0x10] sm:$0xff]
    %v94 = vld [vmem:[#allocation5 + $0x18] sm:$0xff]
    %v95 = vld [vmem:[#allocation5 + $0x20] sm:$0xff]
    %v96 = vld [vmem:[#allocation5 + $0x28] sm:$0xff]
    %v97 = vld [vmem:[#allocation5 + $0x30] sm:$0xff]
    %v98 = vld [vmem:[#allocation5 + $0x38] sm:$0xff]
    %v99 = vld [vmem:[#allocation5 + $0x40] sm:$0xff]
    %v100 = vld [vmem:[#allocation5 + $0x48] sm:$0xff]
    %v101 = vld [vmem:[#allocation5 + $0x50] sm:$0xff]
    %v102 = vld [vmem:[#allocation5 + $0x58] sm:$0xff]
    %v103 = vld [vmem:[#allocation5 + $0x60] sm:$0xff]
    %v104 = vld [vmem:[#allocation5 + $0x68] sm:$0xff]
    %v105 = vld [vmem:[#allocation5 + $0x70] sm:$0xff]
    %v106 = vld [vmem:[#allocation5 + $0x78] sm:$0xff]
    %v107 = vld [vmem:[#allocation7] sm:$0x3]
    %v109 = vperm.slane %v107, 0
    %v110 = vperm.slane %v107, 1
    %v129 = vunpack.c.l.b16 %v91
    %v130 = vunpack.c.h.b16 %v91
    %v131 = vunpack.c.l.b16 %v92
    %v132 = vunpack.c.h.b16 %v92
    %v133 = vunpack.c.l.b16 %v93
    %v134 = vunpack.c.h.b16 %v93
    %v135 = vunpack.c.l.b16 %v94
    %v136 = vunpack.c.h.b16 %v94
    %v137 = vunpack.c.l.b16 %v95
    %v138 = vunpack.c.h.b16 %v95
    %v139 = vunpack.c.l.b16 %v96
    %v140 = vunpack.c.h.b16 %v96
    %v141 = vunpack.c.l.b16 %v97
    %v142 = vunpack.c.h.b16 %v97
    %v143 = vunpack.c.l.b16 %v98
    %v144 = vunpack.c.h.b16 %v98
    %v145 = vunpack.c.l.b16 %v99
    %v146 = vunpack.c.h.b16 %v99
    %v147 = vunpack.c.l.b16 %v100
    %v148 = vunpack.c.h.b16 %v100
    %v149 = vunpack.c.l.b16 %v101
    %v150 = vunpack.c.h.b16 %v101
    %v151 = vunpack.c.l.b16 %v102
    %v152 = vunpack.c.h.b16 %v102
    %v153 = vunpack.c.l.b16 %v103
    %v154 = vunpack.c.h.b16 %v103
    %v155 = vunpack.c.l.b16 %v104
    %v156 = vunpack.c.h.b16 %v104
    %v157 = vunpack.c.l.b16 %v105
    %v158 = vunpack.c.h.b16 %v105
    %v159 = vunpack.c.l.b16 %v106
    %v160 = vunpack.c.h.b16 %v106
    %v161 = vpack.c.b16 %v131, %v129
    %v162 = vpack.c.b16 %v132, %v130
    %v163 = vpack.c.b16 %v135, %v133
    %v164 = vpack.c.b16 %v136, %v134
    %v165 = vpack.c.b16 %v139, %v137
    %v166 = vpack.c.b16 %v140, %v138
    %v167 = vpack.c.b16 %v143, %v141
    %v168 = vpack.c.b16 %v144, %v142
    %v169 = vpack.c.b16 %v147, %v145
    %v170 = vpack.c.b16 %v148, %v146
    %v171 = vpack.c.b16 %v151, %v149
    %v172 = vpack.c.b16 %v152, %v150
    %v173 = vpack.c.b16 %v155, %v153
    %v174 = vpack.c.b16 %v156, %v154
    %v175 = vpack.c.b16 %v159, %v157
    %v176 = vpack.c.b16 %v160, %v158
    %193 = vmatpush.bf16.msra.mxu0 %v175
    %194 = vmatpush.bf16.msra.mxu0 %v173
    %195 = vmatpush.bf16.msra.mxu0 %v171
    %196 = vmatpush.bf16.msra.mxu0 %v169
    %197 = vmatpush.bf16.msra.mxu0 %v167
    %198 = vmatpush.bf16.msra.mxu0 %v165
    %199 = vmatpush.bf16.msra.mxu0 %v163
    %200 = vmatpush.bf16.msra.mxu0 %v161
    %201 = vmatmul.bf16.gmra.mxu0 %v90
    %v202 = vpop.f32.mrf.mxu0
    %v203 = vadd.f32 %v109, %v202
    %v204 = vpop.f32.mrf.mxu0
    %v205 = vadd.f32 %v109, %v204
    %206 = vdwg.mxu0
    %207 = vmatpush.bf16.msra.mxu0 %v176
    %208 = vmatpush.bf16.msra.mxu0 %v174
    %209 = vmatpush.bf16.msra.mxu0 %v172
    %210 = vmatpush.bf16.msra.mxu0 %v170
    %211 = vmatpush.bf16.msra.mxu0 %v168
    %212 = vmatpush.bf16.msra.mxu0 %v166
    %213 = vmatpush.bf16.msra.mxu0 %v164
    %214 = vmatpush.bf16.msra.mxu0 %v162
    %215 = vmatmul.bf16.gmra.mxu0 %v90
    %v216 = vpop.f32.mrf.mxu0
    %v217 = vadd.f32 %v110, %v216
    %v218 = vpop.f32.mrf.mxu0
    %v219 = vadd.f32 %v110, %v218
    %220 = vdwg.mxu0
    %v221 = vmax.f32 %v203, 0.0
    %v222 = vmax.f32 %v205, 0.0
    %v223 = vpack.c.bf16 %v222, %v221
    %v224 = vld [vmem:[#allocation8] sm:$0xf]
    %v225 = vld [vmem:[#allocation8 + $0x4] sm:$0xf]
    %v226 = vld [vmem:[#allocation8 + $0x8] sm:$0xf]
    %v227 = vld [vmem:[#allocation8 + $0xc] sm:$0xf]
    %v228 = vld [vmem:[#allocation8 + $0x10] sm:$0xf]
    %v229 = vld [vmem:[#allocation8 + $0x14] sm:$0xf]
    %v230 = vld [vmem:[#allocation8 + $0x18] sm:$0xf]
    %v231 = vld [vmem:[#allocation8 + $0x1c] sm:$0xf]
    %v232 = vld [vmem:[#allocation8 + $0x20] sm:$0xf]
    %v233 = vld [vmem:[#allocation8 + $0x24] sm:$0xf]
    %v234 = vld [vmem:[#allocation8 + $0x28] sm:$0xf]
    %v235 = vld [vmem:[#allocation8 + $0x2c] sm:$0xf]
    %v236 = vld [vmem:[#allocation8 + $0x30] sm:$0xf]
    %v237 = vld [vmem:[#allocation8 + $0x34] sm:$0xf]
    %v238 = vld [vmem:[#allocation8 + $0x38] sm:$0xf]
    %v239 = vld [vmem:[#allocation8 + $0x3c] sm:$0xf]
    %v240 = vld [vmem:[%s4] sm:$0x1]
    %v242 = vperm.slane %v240, 0
    %v260 = vunpack.c.l.b16 %v224
    %v261 = vunpack.c.l.b16 %v225
    %v262 = vunpack.c.l.b16 %v226
    %v263 = vunpack.c.l.b16 %v227
    %v264 = vunpack.c.l.b16 %v228
    %v265 = vunpack.c.l.b16 %v229
    %v266 = vunpack.c.l.b16 %v230
    %v267 = vunpack.c.l.b16 %v231
    %v268 = vunpack.c.l.b16 %v232
    %v269 = vunpack.c.l.b16 %v233
    %v270 = vunpack.c.l.b16 %v234
    %v271 = vunpack.c.l.b16 %v235
    %v272 = vunpack.c.l.b16 %v236
    %v273 = vunpack.c.l.b16 %v237
    %v274 = vunpack.c.l.b16 %v238
    %v275 = vunpack.c.l.b16 %v239
    %v276 = vpack.c.b16 %v261, %v260
    %v277 = vpack.c.b16 %v263, %v262
    %v278 = vpack.c.b16 %v265, %v264
    %v279 = vpack.c.b16 %v267, %v266
    %v280 = vpack.c.b16 %v269, %v268
    %v281 = vpack.c.b16 %v271, %v270
    %v282 = vpack.c.b16 %v273, %v272
    %v283 = vpack.c.b16 %v275, %v274
    %292 = vmatpush.bf16.msra.mxu0 %v283
    %293 = vmatpush.bf16.msra.mxu0 %v282
    %294 = vmatpush.bf16.msra.mxu0 %v281
    %295 = vmatpush.bf16.msra.mxu0 %v280
    %296 = vmatpush.bf16.msra.mxu0 %v279
    %297 = vmatpush.bf16.msra.mxu0 %v278
    %298 = vmatpush.bf16.msra.mxu0 %v277
    %299 = vmatpush.bf16.msra.mxu0 %v276
    %300 = vmatmul.bf16.gmra.mxu0 %v223
    %v301 = vpop.f32.mrf.mxu0
    %v302 = vadd.f32 %v242, %v301
    %v303 = vpop.f32.mrf.mxu0
    %v304 = vadd.f32 %v242, %v303
    %305 = vdwg.mxu0
    %v306 = vadd.f32 %v302, %v217
    %v307 = vadd.f32 %v304, %v219
    %308 = vadd.xlane.f32.xlu0 %v306
    %v309 = vpop.xlane.xlu0 %308
    %310 = vadd.xlane.f32.xlu0 %v307
    %v311 = vpop.xlane.xlu0 %310
    %v312 = vmul.f32 %v309, 0.03125
    %v313 = vmul.f32 %v311, 0.03125
    %v314 = vlaneseq
    %v315 = vand.u32 %v314, 127
    %vm316 = vcmp.lt.s32.totalorder %v315, 32
    %v317 = vsel %vm316, 1, 0
    %v318 = vcvt.s32.f32 %v317
    %v319 = vsub.f32 %v306, %v312
    %v320 = vsub.f32 %v307, %v313
    %v321 = vmul.f32 %v319, %v318
    %v322 = vmul.f32 %v320, %v318
    %v323 = vmul.f32 %v321, %v321
    %v324 = vmul.f32 %v322, %v322
    %325 = vadd.xlane.f32.xlu0 %v323
    %v326 = vpop.xlane.xlu0 %325
    %327 = vadd.xlane.f32.xlu0 %v324
    %v328 = vpop.xlane.xlu0 %327
    %v329 = vmul.f32 %v326, 0.03125
    %v330 = vmul.f32 %v328, 0.03125
    %v331 = vadd.f32 %v329, 1e-06
    %v332 = vadd.f32 %v330, 1e-06
    %v333 = vrsqrt.pop %v331
    %v334 = vmul.f32 %v333, %v331
    %v335 = vmul.f32 %v334, %v333
    %v336 = vmul.f32 0.5, %v335
    %v337 = vsub.f32 1.5, %v336
    %v338 = vmul.f32 %v333, %v337
    %vm339 = vweird.f32 %v331
    %vm340 = vweird.f32 %v333
    %vm341 = vmor %vm339, %vm340
    %v342 = vsel %vm341, %v333, %v338
    %v343 = vrsqrt.pop %v332
    %v344 = vmul.f32 %v343, %v332
    %v345 = vmul.f32 %v344, %v343
    %v346 = vmul.f32 0.5, %v345
    %v347 = vsub.f32 1.5, %v346
    %v348 = vmul.f32 %v343, %v347
    %vm349 = vweird.f32 %v332
    %vm350 = vweird.f32 %v343
    %vm351 = vmor %vm349, %vm350
    %v352 = vsel %vm351, %v343, %v348
    %v353 = vmul.f32 %v321, %v342
    %v354 = vmul.f32 %v322, %v352
    %v355 = vld [vmem:[%s5] sm:$0x1]
    %v357 = vperm.slane %v355, 0
    %v359 = vmul.f32 %v353, %v357
    %v360 = vmul.f32 %v354, %v357
    %v361 = vld [vmem:[%s6] sm:$0x1]
    %v363 = vperm.slane %v361, 0
    %v365 = vadd.f32 %v359, %v363
    %v366 = vadd.f32 %v360, %v363
    %367 = vst [vmem:[#allocation10] sm:$0xff] %v365
    %368 = vst [vmem:[#allocation10 + $0x8] sm:$0xff] %v366
    // Predicated region
    $region46: #{tpu_custom_call.1} parent=1 // pred_check
      _
    $region47: #{tpu_custom_call.1} parent=1 // pred_check_branch
      %370 = sbr.rel (0) target = $region49
    $region48: #{tpu_custom_call.1} parent=1 // pred_region
      %372 = vsyncadd [#allocation4], 0
      %s373 = sshll.u32 [#allocation10], 4
      %s374 = int_to_ptr.vmem [resolvable:$true] %s373
      %s375 = sshll.u32 %s7, 4
      %s376 = int_to_ptr.hbm [resolvable:$true] %s375
      %381 = dma.vmem_to_hbm [thread:$0]  %s374, 256, %s376, [#allocation4], 128, 128, 8
    $region49: #{tpu_custom_call.1} parent=1 // pred_fallthru
      _
    // Predicated region
    $region50: #{tpu_custom_call.1} parent=1 // pred_check
      _
    $region51: #{tpu_custom_call.1} parent=1 // pred_check_branch
      %383 = sbr.rel (0) target = $region53
    $region52: #{tpu_custom_call.1} parent=1 // pred_region
      %385 = dma.done [#allocation4], 256
    $region53: #{tpu_custom_call.1} parent=1 // pred_fallthru
      _
    %386 = vsyncpa [#allocation3], 1
    %387 = vsyncpa [#allocation6], 1
    %388 = vsyncpa [#allocation9], 1
    %389 = vsyncpa [#allocation4], 1

</llo_original>
